<compile_context>
chip_gen: v5e
topology: v5e:2x2
jax: 0.10.0
libtpu: 0.0.40
codegen_flags: <defaults>
</compile_context>

<pallas_src>
import jax
import jax.numpy as jnp
from jax.experimental import pallas as pl
from jax.experimental.pallas import tpu as pltpu


def _color_split_kernel(hsv_ref, mask_ref, qcnt_ref):
    """One (batch, outer-chunk, inner-row-tile) grid step.

    hsv_ref  : (1, 3, R, 128) f32  H/S/V planes of one spatial row tile
    mask_ref : (1, 5, R, 128) f32  per-color 0/1 masks for this tile
    qcnt_ref : (1, 5, 128)    f32  per-color, per-lane partial counts; resident
                                   accumulator across the inner grid axis
    """
    i = pl.program_id(2)

    @pl.when(i == 0)
    def _init():
        qcnt_ref[...] = jnp.zeros_like(qcnt_ref)

    h = hsv_ref[0, 0]        # (R, 128)
    s = hsv_ref[0, 1]
    v = hsv_ref[0, 2]

    # Shared sub-predicates (green/blue/red share the S range, green/red the V
    # range).  Upper bounds of 255 are trimmed: valid OpenCV HSV never exceeds
    # 255, and zero-padded pixels still fail every color below.
    s_ge_51 = 51.0 <= s
    v_30_215 = jnp.logical_and(30.0 <= v, v <= 215.0)

    def emit(c, mask_bool):
        m = mask_bool.astype(jnp.float32)
        mask_ref[0, c] = m                                        # full, unmasked store
        qcnt_ref[0, c:c + 1, :] += jnp.sum(m, axis=0, keepdims=True)

    # Color order must match the PyTorch dict insertion order:
    #   0: yellow, 1: green, 2: blue, 3: white, 4: red
    emit(0, jnp.logical_and(jnp.logical_and(15.0 <= h, h <= 45.0),
                            jnp.logical_and(100.0 <= s, 100.0 <= v)))
    emit(1, jnp.logical_and(jnp.logical_and(45.0 <= h, h <= 75.0),
                            jnp.logical_and(s_ge_51, v_30_215)))
    emit(2, jnp.logical_and(jnp.logical_and(75.0 <= h, h <= 135.0),
                            jnp.logical_and(s_ge_51,
                                            jnp.logical_and(21.0 <= v, v <= 128.0))))
    # white: the S range [0, 255] is trivially true for valid HSV -> dropped.
    emit(3, jnp.logical_and(jnp.logical_and(50.0 <= h, h <= 185.0), 155.0 <= v))
    # red hue wraps: [165, 180] OR [0, 15]
    red_h = jnp.logical_or(jnp.logical_and(165.0 <= h, h <= 180.0),
                           jnp.logical_and(0.0 <= h, h <= 15.0))
    emit(4, jnp.logical_and(red_h, jnp.logical_and(s_ge_51, v_30_215)))


def two_phase_team_classifier(x, *, rows_per_tile=1024):
    """x: (B, 3, H, W) float HSV image (OpenCV-style H in [0,180], S,V in [0,255]).

    Returns (T, (c_k, q_c_k)):
      T      : (B,)         int32   team index = argmax over per-color counts
      c_k    : (B, 5, H, W) float32 per-color binary masks
      q_c_k  : (B, 5)       float32 per-color pixel counts
    """
    B, C, H, W = x.shape
    assert C == 3, "expected HSV input with 3 channels"
    HW = H * W

    rows = -(-HW // 128)                                   # rows of 128 lanes
    r_tile = min(((int(rows_per_tile) + 7) // 8) * 8,      # multiple of 8
                 ((rows + 7) // 8) * 8)
    n_r = -(-rows // r_tile)

    # v7x has 2 TensorCores: with an odd (or 1) batch, split the spatial row
    # tiles into 2 parallel chunks so both cores get work (no-op on v5e/v6e).
    n_outer = 2 if (B % 2 == 1 and n_r >= 2) else 1
    n_inner = -(-n_r // n_outer)
    rows_pad = n_outer * n_inner * r_tile
    hw_pad = rows_pad * 128

    flat = x.reshape(B, 3, HW).astype(jnp.float32)
    if hw_pad != HW:
        # Zero padding fails every color test (each color needs S>=51 / S>=100,
        # and white needs H>=50 and V>=155), so padded pixels never count.
        flat = jnp.pad(flat, ((0, 0), (0, 0), (0, hw_pad - HW)))
    xin = flat.reshape(B, 3, rows_pad, 128)

    mask4, qcnt = pl.pallas_call(
        _color_split_kernel,
        grid=(B, n_outer, n_inner),
        in_specs=[pl.BlockSpec((1, 3, r_tile, 128),
                               lambda b, o, i: (b, 0, o * n_inner + i, 0))],
        out_specs=(
            pl.BlockSpec((1, 5, r_tile, 128),
                         lambda b, o, i: (b, 0, o * n_inner + i, 0)),
            pl.BlockSpec((1, 5, 128),                      # resident over i
                         lambda b, o, i: (b * n_outer + o, 0, 0)),
        ),
        out_shape=(
            jax.ShapeDtypeStruct((B, 5, rows_pad, 128), jnp.float32),
            jax.ShapeDtypeStruct((B * n_outer, 5, 128), jnp.float32),
        ),
        compiler_params=pltpu.CompilerParams(
            dimension_semantics=("parallel", "parallel", "arbitrary"),
            vmem_limit_bytes=32 * 1024 * 1024,
        ),
    )(xin)

    c_k = mask4.reshape(B, 5, hw_pad)
    if hw_pad != HW:
        c_k = c_k[:, :, :HW]
    c_k = c_k.reshape(B, 5, H, W)

    # Tiny final reductions done in XLA: 128-lane count reduce + (B,5) argmax.
    q_c_k = qcnt.reshape(B, n_outer, 5, 128).sum(axis=(1, 3))
    T = jnp.argmax(q_c_k, axis=1)
    return T, (c_k, q_c_k)


def _reference_forward(x):
    """Pure-JAX transcription of the PyTorch module (untrimmed bounds)."""
    hsv = x.astype(jnp.float32)
    h, s, v = hsv[:, 0], hsv[:, 1], hsv[:, 2]
    color_range = {
        'yellow': [[15, 45], [100, 255], [100, 255]],
        'green': [[45, 75], [51, 255], [30, 215]],
        'blue': [[75, 135], [51, 255], [21, 128]],
        'white': [[50, 185], [0, 255], [155, 255]],
        'red': [[-15, 15], [51, 255], [30, 215]],
    }
    masks = []
    for k, r in color_range.items():
        if k == 'red':
            hm = ((r[0][0] + 180 <= h) & (h <= 180)) | ((0 <= h) & (h <= r[0][1]))
        else:
            hm = (r[0][0] <= h) & (h <= r[0][1])
        sm = (r[1][0] <= s) & (s <= r[1][1])
        vm = (r[2][0] <= v) & (v <= r[2][1])
        masks.append((hm & sm & vm).astype(jnp.float32))
    c_k = jnp.stack(masks, axis=1)
    q_c_k = c_k.sum(axis=(2, 3))
    return jnp.argmax(q_c_k, axis=1), c_k, q_c_k


if __name__ == "__main__":
    def make_hsv(key, shape):
        b, _, hh, ww = shape
        kh, ks, kv = jax.random.split(key, 3)
        h = jnp.floor(jax.random.uniform(kh, (b, 1, hh, ww), minval=0., maxval=181.))
        s = jnp.floor(jax.random.uniform(ks, (b, 1, hh, ww), minval=0., maxval=256.))
        v = jnp.floor(jax.random.uniform(kv, (b, 1, hh, ww), minval=0., maxval=256.))
        return jnp.concatenate([h, s, v], axis=1).astype(jnp.float32)

    key = jax.random.PRNGKey(0)
    cases = [
        (dict(), (2, 3, 16, 16)),                 # 128-aligned HW, padded up to one row tile
        (dict(), (1, 3, 23, 19)),                 # ragged HW (lane padding path)
        (dict(rows_per_tile=8), (1, 3, 64, 64)),  # exercises the n_outer=2 core split
    ]
    for idx, (kw, shape) in enumerate(cases):
        key, sub = jax.random.split(key)
        x = make_hsv(sub, shape)
        T, (c_k, q_c_k) = two_phase_team_classifier(x, **kw)
        jax.block_until_ready((T, c_k, q_c_k))

        T_r, c_r, q_r = _reference_forward(x)
        B = shape[0]
        assert T.shape == (B,)
        assert c_k.shape == c_r.shape and c_k.dtype == jnp.float32
        assert q_c_k.shape == (B, 5) and q_c_k.dtype == jnp.float32
        assert bool(jnp.array_equal(c_k, c_r)), f"mask mismatch (case {idx})"
        assert bool(jnp.allclose(q_c_k, q_r)), f"count mismatch (case {idx})"
        assert bool(jnp.array_equal(T, T_r)), f"team index mismatch (case {idx})"
        assert bool(jnp.allclose(q_c_k, c_k.sum(axis=(2, 3))))
    print("KERNEL_OK")
</pallas_src>

<mosaic_0001>
module attributes {stable_mosaic.version = 11 : i64} {
  func.func @_color_split_kernel(%arg0: i32, %arg1: i32, %arg2: i32, %arg3: memref<1x3x8x128xf32, #tpu.memory_space<vmem>>, %arg4: memref<1x5x8x128xf32, #tpu.memory_space<vmem>>, %arg5: memref<1x5x128xf32, #tpu.memory_space<vmem>>) attributes {dimension_semantics = [#tpu.dimension_semantics<parallel>, #tpu.dimension_semantics<parallel>, #tpu.dimension_semantics<arbitrary>], iteration_bounds = array<i64: 2, 1, 1>, scalar_prefetch = 0 : i64, scratch_operands = 0 : i64, tpu.core_type = #tpu.core_type<tc>, window_params = [{transform_indices = @transform_0, window_bounds = array<i64: 1, 3, 8, 128>}, {transform_indices = @transform_1, window_bounds = array<i64: 1, 5, 8, 128>}, {transform_indices = @transform_2, window_bounds = array<i64: 1, 5, 128>}]} {
    %c0_i32 = arith.constant 0 : i32
    %0 = arith.cmpi eq, %arg2, %c0_i32 : i32
    %1 = arith.extui %0 : i1 to i32
    %c0_i32_0 = arith.constant 0 : i32
    %2 = arith.cmpi ne, %1, %c0_i32_0 : i32
    scf.if %2 {
      %cst_82 = arith.constant 0.000000e+00 : f32
      %132 = vector.broadcast %cst_82 : f32 to vector<1x5x128xf32>
      %c0_83 = arith.constant 0 : index
      %c0_84 = arith.constant 0 : index
      %c0_85 = arith.constant 0 : index
      %133 = vector.load %arg5[%c0_83, %c0_84, %c0_85] : memref<1x5x128xf32, #tpu.memory_space<vmem>>, vector<1x5x128xf32>
      tpu.vector_store %arg5[%c0_83, %c0_84, %c0_85], %132 {strides = array<i32>} : memref<1x5x128xf32, #tpu.memory_space<vmem>>, vector<1x5x128xf32>,
    } else {
    }
    %c0 = arith.constant 0 : index
    %c0_1 = arith.constant 0 : index
    %c0_2 = arith.constant 0 : index
    %c0_3 = arith.constant 0 : index
    %3 = vector.load %arg3[%c0, %c0_1, %c0_2, %c0_3] : memref<1x3x8x128xf32, #tpu.memory_space<vmem>>, vector<1x1x8x128xf32>
    %4 = vector.shape_cast %3 : vector<1x1x8x128xf32> to vector<8x128xf32>
    %c0_4 = arith.constant 0 : index
    %c1 = arith.constant 1 : index
    %c0_5 = arith.constant 0 : index
    %c0_6 = arith.constant 0 : index
    %5 = vector.load %arg3[%c0_4, %c1, %c0_5, %c0_6] : memref<1x3x8x128xf32, #tpu.memory_space<vmem>>, vector<1x1x8x128xf32>
    %6 = vector.shape_cast %5 : vector<1x1x8x128xf32> to vector<8x128xf32>
    %c0_7 = arith.constant 0 : index
    %c2 = arith.constant 2 : index
    %c0_8 = arith.constant 0 : index
    %c0_9 = arith.constant 0 : index
    %7 = vector.load %arg3[%c0_7, %c2, %c0_8, %c0_9] : memref<1x3x8x128xf32, #tpu.memory_space<vmem>>, vector<1x1x8x128xf32>
    %8 = vector.shape_cast %7 : vector<1x1x8x128xf32> to vector<8x128xf32>
    %cst = arith.constant 5.100000e+01 : f32
    %9 = vector.broadcast %cst : f32 to vector<8x128xf32>
    %10 = arith.cmpf oge, %6, %9 : vector<8x128xf32>
    %cst_10 = arith.constant 3.000000e+01 : f32
    %11 = vector.broadcast %cst_10 : f32 to vector<8x128xf32>
    %12 = arith.cmpf oge, %8, %11 : vector<8x128xf32>
    %cst_11 = arith.constant 2.150000e+02 : f32
    %13 = vector.broadcast %cst_11 : f32 to vector<8x128xf32>
    %14 = arith.cmpf ole, %8, %13 : vector<8x128xf32>
    %15 = arith.andi %12, %14 : vector<8x128xi1>
    %cst_12 = arith.constant 1.500000e+01 : f32
    %16 = vector.broadcast %cst_12 : f32 to vector<8x128xf32>
    %17 = arith.cmpf oge, %4, %16 : vector<8x128xf32>
    %cst_13 = arith.constant 4.500000e+01 : f32
    %18 = vector.broadcast %cst_13 : f32 to vector<8x128xf32>
    %19 = arith.cmpf ole, %4, %18 : vector<8x128xf32>
    %20 = arith.andi %17, %19 : vector<8x128xi1>
    %cst_14 = arith.constant 1.000000e+02 : f32
    %21 = vector.broadcast %cst_14 : f32 to vector<8x128xf32>
    %22 = arith.cmpf oge, %6, %21 : vector<8x128xf32>
    %cst_15 = arith.constant 1.000000e+02 : f32
    %23 = vector.broadcast %cst_15 : f32 to vector<8x128xf32>
    %24 = arith.cmpf oge, %8, %23 : vector<8x128xf32>
    %25 = arith.andi %22, %24 : vector<8x128xi1>
    %26 = arith.andi %20, %25 : vector<8x128xi1>
    %27 = arith.extui %26 : vector<8x128xi1> to vector<8x128xi32>
    %28 = arith.sitofp %27 : vector<8x128xi32> to vector<8x128xf32>
    %c0_16 = arith.constant 0 : index
    %c0_17 = arith.constant 0 : index
    %c0_18 = arith.constant 0 : index
    %c0_19 = arith.constant 0 : index
    %29 = vector.load %arg4[%c0_16, %c0_17, %c0_18, %c0_19] : memref<1x5x8x128xf32, #tpu.memory_space<vmem>>, vector<1x1x8x128xf32>
    %30 = vector.shape_cast %29 : vector<1x1x8x128xf32> to vector<8x128xf32>
    %31 = vector.shape_cast %28 : vector<8x128xf32> to vector<1x1x8x128xf32>
    tpu.vector_store %arg4[%c0_16, %c0_17, %c0_18, %c0_19], %31 {strides = array<i32>} : memref<1x5x8x128xf32, #tpu.memory_space<vmem>>, vector<1x1x8x128xf32>,
    %c0_20 = arith.constant 0 : index
    %c0_21 = arith.constant 0 : index
    %c0_22 = arith.constant 0 : index
    %32 = vector.load %arg5[%c0_20, %c0_21, %c0_22] : memref<1x5x128xf32, #tpu.memory_space<vmem>>, vector<1x1x128xf32>
    %33 = vector.shape_cast %32 : vector<1x1x128xf32> to vector<1x128xf32>
    %cst_23 = arith.constant dense<0.000000e+00> : vector<128xf32>
    %34 = vector.multi_reduction <add>, %28, %cst_23 [0] : vector<8x128xf32> to vector<128xf32>
    %35 = vector.shape_cast %34 : vector<128xf32> to vector<1x128xf32>
    %36 = arith.addf %33, %35 : vector<1x128xf32>
    %c0_24 = arith.constant 0 : index
    %c0_25 = arith.constant 0 : index
    %c0_26 = arith.constant 0 : index
    %37 = vector.load %arg5[%c0_24, %c0_25, %c0_26] : memref<1x5x128xf32, #tpu.memory_space<vmem>>, vector<1x1x128xf32>
    %38 = vector.shape_cast %37 : vector<1x1x128xf32> to vector<1x128xf32>
    %39 = vector.shape_cast %36 : vector<1x128xf32> to vector<1x1x128xf32>
    tpu.vector_store %arg5[%c0_24, %c0_25, %c0_26], %39 {strides = array<i32>} : memref<1x5x128xf32, #tpu.memory_space<vmem>>, vector<1x1x128xf32>,
    %cst_27 = arith.constant 4.500000e+01 : f32
    %40 = vector.broadcast %cst_27 : f32 to vector<8x128xf32>
    %41 = arith.cmpf oge, %4, %40 : vector<8x128xf32>
    %cst_28 = arith.constant 7.500000e+01 : f32
    %42 = vector.broadcast %cst_28 : f32 to vector<8x128xf32>
    %43 = arith.cmpf ole, %4, %42 : vector<8x128xf32>
    %44 = arith.andi %41, %43 : vector<8x128xi1>
    %45 = arith.andi %10, %15 : vector<8x128xi1>
    %46 = arith.andi %44, %45 : vector<8x128xi1>
    %47 = arith.extui %46 : vector<8x128xi1> to vector<8x128xi32>
    %48 = arith.sitofp %47 : vector<8x128xi32> to vector<8x128xf32>
    %c0_29 = arith.constant 0 : index
    %c1_30 = arith.constant 1 : index
    %c0_31 = arith.constant 0 : index
    %c0_32 = arith.constant 0 : index
    %49 = vector.load %arg4[%c0_29, %c1_30, %c0_31, %c0_32] : memref<1x5x8x128xf32, #tpu.memory_space<vmem>>, vector<1x1x8x128xf32>
    %50 = vector.shape_cast %49 : vector<1x1x8x128xf32> to vector<8x128xf32>
    %51 = vector.shape_cast %48 : vector<8x128xf32> to vector<1x1x8x128xf32>
    tpu.vector_store %arg4[%c0_29, %c1_30, %c0_31, %c0_32], %51 {strides = array<i32>} : memref<1x5x8x128xf32, #tpu.memory_space<vmem>>, vector<1x1x8x128xf32>,
    %c0_33 = arith.constant 0 : index
    %c1_34 = arith.constant 1 : index
    %c0_35 = arith.constant 0 : index
    %52 = vector.load %arg5[%c0_33, %c1_34, %c0_35] : memref<1x5x128xf32, #tpu.memory_space<vmem>>, vector<1x1x128xf32>
    %53 = vector.shape_cast %52 : vector<1x1x128xf32> to vector<1x128xf32>
    %cst_36 = arith.constant dense<0.000000e+00> : vector<128xf32>
    %54 = vector.multi_reduction <add>, %48, %cst_36 [0] : vector<8x128xf32> to vector<128xf32>
    %55 = vector.shape_cast %54 : vector<128xf32> to vector<1x128xf32>
    %56 = arith.addf %53, %55 : vector<1x128xf32>
    %c0_37 = arith.constant 0 : index
    %c1_38 = arith.constant 1 : index
    %c0_39 = arith.constant 0 : index
    %57 = vector.load %arg5[%c0_37, %c1_38, %c0_39] : memref<1x5x128xf32, #tpu.memory_space<vmem>>, vector<1x1x128xf32>
    %58 = vector.shape_cast %57 : vector<1x1x128xf32> to vector<1x128xf32>
    %59 = vector.shape_cast %56 : vector<1x128xf32> to vector<1x1x128xf32>
    tpu.vector_store %arg5[%c0_37, %c1_38, %c0_39], %59 {strides = array<i32>} : memref<1x5x128xf32, #tpu.memory_space<vmem>>, vector<1x1x128xf32>,
    %cst_40 = arith.constant 7.500000e+01 : f32
    %60 = vector.broadcast %cst_40 : f32 to vector<8x128xf32>
    %61 = arith.cmpf oge, %4, %60 : vector<8x128xf32>
    %cst_41 = arith.constant 1.350000e+02 : f32
    %62 = vector.broadcast %cst_41 : f32 to vector<8x128xf32>
    %63 = arith.cmpf ole, %4, %62 : vector<8x128xf32>
    %64 = arith.andi %61, %63 : vector<8x128xi1>
    %cst_42 = arith.constant 2.100000e+01 : f32
    %65 = vector.broadcast %cst_42 : f32 to vector<8x128xf32>
    %66 = arith.cmpf oge, %8, %65 : vector<8x128xf32>
    %cst_43 = arith.constant 1.280000e+02 : f32
    %67 = vector.broadcast %cst_43 : f32 to vector<8x128xf32>
    %68 = arith.cmpf ole, %8, %67 : vector<8x128xf32>
    %69 = arith.andi %66, %68 : vector<8x128xi1>
    %70 = arith.andi %10, %69 : vector<8x128xi1>
    %71 = arith.andi %64, %70 : vector<8x128xi1>
    %72 = arith.extui %71 : vector<8x128xi1> to vector<8x128xi32>
    %73 = arith.sitofp %72 : vector<8x128xi32> to vector<8x128xf32>
    %c0_44 = arith.constant 0 : index
    %c2_45 = arith.constant 2 : index
    %c0_46 = arith.constant 0 : index
    %c0_47 = arith.constant 0 : index
    %74 = vector.load %arg4[%c0_44, %c2_45, %c0_46, %c0_47] : memref<1x5x8x128xf32, #tpu.memory_space<vmem>>, vector<1x1x8x128xf32>
    %75 = vector.shape_cast %74 : vector<1x1x8x128xf32> to vector<8x128xf32>
    %76 = vector.shape_cast %73 : vector<8x128xf32> to vector<1x1x8x128xf32>
    tpu.vector_store %arg4[%c0_44, %c2_45, %c0_46, %c0_47], %76 {strides = array<i32>} : memref<1x5x8x128xf32, #tpu.memory_space<vmem>>, vector<1x1x8x128xf32>,
    %c0_48 = arith.constant 0 : index
    %c2_49 = arith.constant 2 : index
    %c0_50 = arith.constant 0 : index
    %77 = vector.load %arg5[%c0_48, %c2_49, %c0_50] : memref<1x5x128xf32, #tpu.memory_space<vmem>>, vector<1x1x128xf32>
    %78 = vector.shape_cast %77 : vector<1x1x128xf32> to vector<1x128xf32>
    %cst_51 = arith.constant dense<0.000000e+00> : vector<128xf32>
    %79 = vector.multi_reduction <add>, %73, %cst_51 [0] : vector<8x128xf32> to vector<128xf32>
    %80 = vector.shape_cast %79 : vector<128xf32> to vector<1x128xf32>
    %81 = arith.addf %78, %80 : vector<1x128xf32>
    %c0_52 = arith.constant 0 : index
    %c2_53 = arith.constant 2 : index
    %c0_54 = arith.constant 0 : index
    %82 = vector.load %arg5[%c0_52, %c2_53, %c0_54] : memref<1x5x128xf32, #tpu.memory_space<vmem>>, vector<1x1x128xf32>
    %83 = vector.shape_cast %82 : vector<1x1x128xf32> to vector<1x128xf32>
    %84 = vector.shape_cast %81 : vector<1x128xf32> to vector<1x1x128xf32>
    tpu.vector_store %arg5[%c0_52, %c2_53, %c0_54], %84 {strides = array<i32>} : memref<1x5x128xf32, #tpu.memory_space<vmem>>, vector<1x1x128xf32>,
    %cst_55 = arith.constant 5.000000e+01 : f32
    %85 = vector.broadcast %cst_55 : f32 to vector<8x128xf32>
    %86 = arith.cmpf oge, %4, %85 : vector<8x128xf32>
    %cst_56 = arith.constant 1.850000e+02 : f32
    %87 = vector.broadcast %cst_56 : f32 to vector<8x128xf32>
    %88 = arith.cmpf ole, %4, %87 : vector<8x128xf32>
    %89 = arith.andi %86, %88 : vector<8x128xi1>
    %cst_57 = arith.constant 1.550000e+02 : f32
    %90 = vector.broadcast %cst_57 : f32 to vector<8x128xf32>
    %91 = arith.cmpf oge, %8, %90 : vector<8x128xf32>
    %92 = arith.andi %89, %91 : vector<8x128xi1>
    %93 = arith.extui %92 : vector<8x128xi1> to vector<8x128xi32>
    %94 = arith.sitofp %93 : vector<8x128xi32> to vector<8x128xf32>
    %c0_58 = arith.constant 0 : index
    %c3 = arith.constant 3 : index
    %c0_59 = arith.constant 0 : index
    %c0_60 = arith.constant 0 : index
    %95 = vector.load %arg4[%c0_58, %c3, %c0_59, %c0_60] : memref<1x5x8x128xf32, #tpu.memory_space<vmem>>, vector<1x1x8x128xf32>
    %96 = vector.shape_cast %95 : vector<1x1x8x128xf32> to vector<8x128xf32>
    %97 = vector.shape_cast %94 : vector<8x128xf32> to vector<1x1x8x128xf32>
    tpu.vector_store %arg4[%c0_58, %c3, %c0_59, %c0_60], %97 {strides = array<i32>} : memref<1x5x8x128xf32, #tpu.memory_space<vmem>>, vector<1x1x8x128xf32>,
    %c0_61 = arith.constant 0 : index
    %c3_62 = arith.constant 3 : index
    %c0_63 = arith.constant 0 : index
    %98 = vector.load %arg5[%c0_61, %c3_62, %c0_63] : memref<1x5x128xf32, #tpu.memory_space<vmem>>, vector<1x1x128xf32>
    %99 = vector.shape_cast %98 : vector<1x1x128xf32> to vector<1x128xf32>
    %cst_64 = arith.constant dense<0.000000e+00> : vector<128xf32>
    %100 = vector.multi_reduction <add>, %94, %cst_64 [0] : vector<8x128xf32> to vector<128xf32>
    %101 = vector.shape_cast %100 : vector<128xf32> to vector<1x128xf32>
    %102 = arith.addf %99, %101 : vector<1x128xf32>
    %c0_65 = arith.constant 0 : index
    %c3_66 = arith.constant 3 : index
    %c0_67 = arith.constant 0 : index
    %103 = vector.load %arg5[%c0_65, %c3_66, %c0_67] : memref<1x5x128xf32, #tpu.memory_space<vmem>>, vector<1x1x128xf32>
    %104 = vector.shape_cast %103 : vector<1x1x128xf32> to vector<1x128xf32>
    %105 = vector.shape_cast %102 : vector<1x128xf32> to vector<1x1x128xf32>
    tpu.vector_store %arg5[%c0_65, %c3_66, %c0_67], %105 {strides = array<i32>} : memref<1x5x128xf32, #tpu.memory_space<vmem>>, vector<1x1x128xf32>,
    %cst_68 = arith.constant 1.650000e+02 : f32
    %106 = vector.broadcast %cst_68 : f32 to vector<8x128xf32>
    %107 = arith.cmpf oge, %4, %106 : vector<8x128xf32>
    %cst_69 = arith.constant 1.800000e+02 : f32
    %108 = vector.broadcast %cst_69 : f32 to vector<8x128xf32>
    %109 = arith.cmpf ole, %4, %108 : vector<8x128xf32>
    %110 = arith.andi %107, %109 : vector<8x128xi1>
    %cst_70 = arith.constant 0.000000e+00 : f32
    %111 = vector.broadcast %cst_70 : f32 to vector<8x128xf32>
    %112 = arith.cmpf oge, %4, %111 : vector<8x128xf32>
    %cst_71 = arith.constant 1.500000e+01 : f32
    %113 = vector.broadcast %cst_71 : f32 to vector<8x128xf32>
    %114 = arith.cmpf ole, %4, %113 : vector<8x128xf32>
    %115 = arith.andi %112, %114 : vector<8x128xi1>
    %116 = arith.ori %110, %115 : vector<8x128xi1>
    %117 = arith.andi %10, %15 : vector<8x128xi1>
    %118 = arith.andi %116, %117 : vector<8x128xi1>
    %119 = arith.extui %118 : vector<8x128xi1> to vector<8x128xi32>
    %120 = arith.sitofp %119 : vector<8x128xi32> to vector<8x128xf32>
    %c0_72 = arith.constant 0 : index
    %c4 = arith.constant 4 : index
    %c0_73 = arith.constant 0 : index
    %c0_74 = arith.constant 0 : index
    %121 = vector.load %arg4[%c0_72, %c4, %c0_73, %c0_74] : memref<1x5x8x128xf32, #tpu.memory_space<vmem>>, vector<1x1x8x128xf32>
    %122 = vector.shape_cast %121 : vector<1x1x8x128xf32> to vector<8x128xf32>
    %123 = vector.shape_cast %120 : vector<8x128xf32> to vector<1x1x8x128xf32>
    tpu.vector_store %arg4[%c0_72, %c4, %c0_73, %c0_74], %123 {strides = array<i32>} : memref<1x5x8x128xf32, #tpu.memory_space<vmem>>, vector<1x1x8x128xf32>,
    %c0_75 = arith.constant 0 : index
    %c4_76 = arith.constant 4 : index
    %c0_77 = arith.constant 0 : index
    %124 = vector.load %arg5[%c0_75, %c4_76, %c0_77] : memref<1x5x128xf32, #tpu.memory_space<vmem>>, vector<1x1x128xf32>
    %125 = vector.shape_cast %124 : vector<1x1x128xf32> to vector<1x128xf32>
    %cst_78 = arith.constant dense<0.000000e+00> : vector<128xf32>
    %126 = vector.multi_reduction <add>, %120, %cst_78 [0] : vector<8x128xf32> to vector<128xf32>
    %127 = vector.shape_cast %126 : vector<128xf32> to vector<1x128xf32>
    %128 = arith.addf %125, %127 : vector<1x128xf32>
    %c0_79 = arith.constant 0 : index
    %c4_80 = arith.constant 4 : index
    %c0_81 = arith.constant 0 : index
    %129 = vector.load %arg5[%c0_79, %c4_80, %c0_81] : memref<1x5x128xf32, #tpu.memory_space<vmem>>, vector<1x1x128xf32>
    %130 = vector.shape_cast %129 : vector<1x1x128xf32> to vector<1x128xf32>
    %131 = vector.shape_cast %128 : vector<1x128xf32> to vector<1x1x128xf32>
    tpu.vector_store %arg5[%c0_79, %c4_80, %c0_81], %131 {strides = array<i32>} : memref<1x5x128xf32, #tpu.memory_space<vmem>>, vector<1x1x128xf32>,
    return
  }
  func.func @transform_0(%arg0: i32, %arg1: i32, %arg2: i32) -> (i32, i32, i32, i32) {
    %c1_i32 = arith.constant 1 : i32
    %0 = arith.muli %arg1, %c1_i32 : i32
    %1 = arith.addi %0, %arg2 : i32
    %c0_i32 = arith.constant 0 : i32
    %c0_i32_0 = arith.constant 0 : i32
    %c0_i32_1 = arith.constant 0 : i32
    return %arg0, %c0_i32, %1, %c0_i32_0 : i32, i32, i32, i32
  }
  func.func @transform_1(%arg0: i32, %arg1: i32, %arg2: i32) -> (i32, i32, i32, i32) {
    %c1_i32 = arith.constant 1 : i32
    %0 = arith.muli %arg1, %c1_i32 : i32
    %1 = arith.addi %0, %arg2 : i32
    %c0_i32 = arith.constant 0 : i32
    %c0_i32_0 = arith.constant 0 : i32
    %c0_i32_1 = arith.constant 0 : i32
    return %arg0, %c0_i32, %1, %c0_i32_0 : i32, i32, i32, i32
  }
  func.func @transform_2(%arg0: i32, %arg1: i32, %arg2: i32) -> (i32, i32, i32) {
    %c1_i32 = arith.constant 1 : i32
    %0 = arith.muli %arg0, %c1_i32 : i32
    %1 = arith.addi %0, %arg1 : i32
    %c0_i32 = arith.constant 0 : i32
    %c0_i32_0 = arith.constant 0 : i32
    %c0_i32_1 = arith.constant 0 : i32
    return %1, %c0_i32, %c0_i32_0 : i32, i32, i32
  }
}

</mosaic_0001>

<llo_original>
// kernel: tpu_custom_call.1
$region0: #{tpu_custom_call.1}
  #allocation0 [shape = 'u32[]', space=smem, size = 0x4, offset = 0x4, fixed_abs, tag = 'smem constant byte address 0x4 - core index']
  #allocation1 [shape = 'u32[72,128]{1,0:T(1,128)}', space=vmem, size = 0x9000, scoped, tag = 'internal scratch']
  %s0 = inlined_call_operand.hbm [shape: f32[2,3,8,128], index: 0, kind: input, shape index: {}]
  %s1 = inlined_call_operand.hbm [shape: f32[2,5,8,128], index: 1, kind: output, shape index: {0}]
  %s2 = inlined_call_operand.vmem [shape: f32[2,5,128], index: 2, kind: output, shape index: {1}]
  %3 = xla_tuple %s1, %s2
  %s4 = sld [smem:[#allocation0]]
  $region53: #{tpu_custom_call.1} parent=0
    _
  %s6 = ssub.s32 1, %s4
  %s7 = scalar_select 0, %s6, %s4
  $region1: #{tpu_custom_call.1} parent=0
    #allocation2 [shape = 'u8[24576]{0}', space=vmem, size = 0x6000, scoped, tag = 'input window, operand 0']
    #allocation3 [shape = 's32[2]{0}', space=sflag, size = 0x8, scoped, tag = 'scoped memory for tpu_custom_call.1']
    #allocation4 [shape = 's32[2]{0}', space=sflag, size = 0x8, scoped, tag = 'scoped memory for tpu_custom_call.1']
    #allocation5 [shape = 'u8[40960]{0}', space=vmem, size = 0xa000, scoped, tag = 'output window, operand 0']
    %8 = vsyncpa [#allocation3], 0
    %s9 = scalar_lea.sflag [#allocation3], 1
    %10 = vsyncpa %s9, 0
    %11 = vsyncpa [#allocation4], 0
    %s12 = scalar_lea.sflag [#allocation4], 1
    %13 = vsyncpa %s12, 0
    loop: start=0, step=1, limit=4
    $region2: #{tpu_custom_call.1} parent=1 // loop_pre_header
      _
    $region3: #{tpu_custom_call.1} parent=1 // loop_header
      %s15 = sphi 0, %s19
      %p16 = scmp.ge.s32.totalorder %s15, 4
      %s22 = sphi 0, %s41
      %s23 = sphi 0, %s37
      %s24 = sphi 0, %s33
      %s25 = sphi 0, %s22
      %s26 = sphi 0, %s23
      %s27 = sphi 0, %s24
      %s28 = sphi 0, %s25
      %s29 = sphi 0, %s26
      %s30 = sphi 0, %s27
      %s48 = sphi 0, %s50
      %s51 = sphi 0, %s48
      %s52 = sphi 0, %s51
      %s68 = sphi 0, %s52
      %s78 = sphi 0, %s80
      %s81 = sphi 0, %s78
      %s82 = sphi 0, %s81
      %s98 = sphi 0, %s82
      %s106 = sphi 0, %s108
      %s109 = sphi 0, %s106
      %s110 = sphi 0, %s109
      %s126 = sphi 0, %s110
    $region4: #{tpu_custom_call.1} parent=1 // loop_header_branch
      %18 = sbr.rel (%p16) target = $region8
    $region5: #{tpu_custom_call.1} parent=1 // loop_body
      %s20 = ssub.s32 %s15, 1
      %s21 = ssub.s32 %s15, 2
      %s31 = sadd.s32 1, %s24
      %p32 = scmp.ge.s32.totalorder %s31, 1
      %s33 = scalar_select %p32, 0, %s31
      %s34 = sadd.s32 1, %s23
      %s35 = scalar_select %p32, %s34, %s23
      %p36 = scmp.ge.s32.totalorder %s35, 1
      %s37 = scalar_select %p36, 0, %s35
      %s38 = sadd.s32 1, %s22
      %s39 = scalar_select %p36, %s38, %s22
      %p40 = scmp.ge.s32.totalorder %s39, 2
      %s41 = scalar_select %p40, 0, %s39
      %s42 = sadd.s32 %s23, %s24
      %s43 = sadd.s32 %s37, %s33
      %s44 = ssub.s32 %s22, %s41
      %s45 = ssub.s32 %s42, %s43
      %s46 = sor.u32 %s44, %s45
      %p47 = scmp.eq.s32.totalorder %s46, 0
      %s49 = sadd.s32 %s48, 1
      %s50 = scalar_select %p47, %s48, %s49
      %p53 = pneg %p47
      %p54 = scmp.eq.s32.totalorder %s15, 1
      %p55 = por %p53, %p54
      %p56 = scmp.ne.s32.totalorder %s48, %s51
      %p57 = scmp.eq.s32.totalorder %s15, 0
      %p58 = por %p56, %p57
      %p59 = scmp.ne.s32.totalorder %s48, %s51
      %p60 = scmp.eq.s32.totalorder %s20, 1
      %p61 = por %p59, %p60
      %p62 = scmp.ne.s32.totalorder %s51, %s52
      %p63 = scmp.eq.s32.totalorder %s20, 0
      %p64 = por %p62, %p63
      %p65 = scmp.ne.s32.totalorder %s51, %s52
      %p66 = scmp.eq.s32.totalorder %s21, 1
      %p67 = por %p65, %p66
      %p69 = scmp.ne.s32.totalorder %s52, %s68
      %p70 = scmp.eq.s32.totalorder %s21, 0
      %p71 = por %p69, %p70
      %s72 = sadd.s32 %s23, %s24
      %s73 = sadd.s32 %s37, %s33
      %s74 = ssub.s32 %s22, %s41
      %s75 = ssub.s32 %s72, %s73
      %s76 = sor.u32 %s74, %s75
      %p77 = scmp.eq.s32.totalorder %s76, 0
      %s79 = sadd.s32 %s78, 1
      %s80 = scalar_select %p77, %s78, %s79
      %p83 = pneg %p77
      %p84 = scmp.eq.s32.totalorder %s15, 1
      %p85 = por %p83, %p84
      %p86 = scmp.ne.s32.totalorder %s78, %s81
      %p87 = scmp.eq.s32.totalorder %s15, 0
      %p88 = por %p86, %p87
      %p89 = scmp.ne.s32.totalorder %s78, %s81
      %p90 = scmp.eq.s32.totalorder %s20, 1
      %p91 = por %p89, %p90
      %p92 = scmp.ne.s32.totalorder %s81, %s82
      %p93 = scmp.eq.s32.totalorder %s20, 0
      %p94 = por %p92, %p93
      %p95 = scmp.ne.s32.totalorder %s81, %s82
      %p96 = scmp.eq.s32.totalorder %s21, 1
      %p97 = por %p95, %p96
      %p99 = scmp.ne.s32.totalorder %s82, %s98
      %p100 = scmp.eq.s32.totalorder %s21, 0
      %p101 = por %p99, %p100
      %s102 = sadd.s32 %s22, %s23
      %s103 = sadd.s32 %s41, %s37
      %s104 = ssub.s32 %s102, %s103
      %p105 = scmp.eq.s32.totalorder %s104, 0
      %s107 = sadd.s32 %s106, 1
      %s108 = scalar_select %p105, %s106, %s107
      %p111 = pneg %p105
      %p112 = scmp.eq.s32.totalorder %s15, 1
      %p113 = por %p111, %p112
      %p114 = scmp.ne.s32.totalorder %s106, %s109
      %p115 = scmp.eq.s32.totalorder %s15, 0
      %p116 = por %p114, %p115
      %p117 = scmp.ne.s32.totalorder %s106, %s109
      %p118 = scmp.eq.s32.totalorder %s20, 1
      %p119 = por %p117, %p118
      %p120 = scmp.ne.s32.totalorder %s109, %s110
      %p121 = scmp.eq.s32.totalorder %s20, 0
      %p122 = por %p120, %p121
      %p123 = scmp.ne.s32.totalorder %s109, %s110
      %p124 = scmp.eq.s32.totalorder %s21, 1
      %p125 = por %p123, %p124
      %p127 = scmp.ne.s32.totalorder %s110, %s126
      %p128 = scmp.eq.s32.totalorder %s21, 0
      %p129 = por %p127, %p128
      %p130 = scmp.le.s32.totalorder 1, %s15
      %p131 = scmp.lt.s32.totalorder %s15, 3
      %p132 = pnand %p130, %p131
      %p133 = pneg %p132
      // Predicated region
      $region9: #{tpu_custom_call.1} parent=5 // pred_check
        _
      $region10: #{tpu_custom_call.1} parent=5 // pred_check_branch
        %135 = sbr.rel (%p132) target = $region12
      $region11: #{tpu_custom_call.1} parent=5 // pred_region
        %s136 = ssub.s32 %s15, 1
      $region12: #{tpu_custom_call.1} parent=5 // pred_fallthru
        _
      %p137 = scmp.lt.s32.totalorder %s15, 2
      // Predicated region
      $region13: #{tpu_custom_call.1} parent=5 // pred_check
        %p138 = pneg %p137
      $region14: #{tpu_custom_call.1} parent=5 // pred_check_branch
        %140 = sbr.rel (%p138) target = $region16
      $region15: #{tpu_custom_call.1} parent=5 // pred_region
        // Predicated region
        $region17: #{tpu_custom_call.1} parent=15 // pred_check
          %p141 = pneg %p58
        $region18: #{tpu_custom_call.1} parent=15 // pred_check_branch
          %143 = sbr.rel (%p141) target = $region20
        $region19: #{tpu_custom_call.1} parent=15 // pred_region
          %s144 = sand.u32 %s48, 1
          %s145 = scalar_lea.sflag [#allocation3], %s144
          %s146 = sand.u32 %s48, 1
          %s147 = smul.addr %s146, 24
          %s148 = scalar_lea.vmem [#allocation2], %s147
          %s149 = sadd.s32 %s23, %s24
          %151 = vsyncadd %s145, 0
          %s152 = smul.addr %s22, 3
          %s153 = sadd.s32 %s149, %s152
          %s154 = smul.addr %s153, 8
          %s155 = scalar_lea.hbm %s0, %s154
          %s156 = sshll.u32 %s155, 4
          %s157 = int_to_ptr.hbm [resolvable:$true] %s156
          %s158 = sshll.u32 %s148, 4
          %s159 = int_to_ptr.vmem [resolvable:$true] %s158
          %164 = dma.hbm_to_vmem [thread:$0]  %s157, 384, %s159, %s145, 128, 128, 8
        $region20: #{tpu_custom_call.1} parent=15 // pred_fallthru
          _
      $region16: #{tpu_custom_call.1} parent=5 // pred_fallthru
        _
      %p165 = scmp.le.s32.totalorder 1, %s15
      %p166 = scmp.lt.s32.totalorder %s15, 3
      %p167 = pnand %p165, %p166
      %p168 = pneg %p167
      // Predicated region
      $region21: #{tpu_custom_call.1} parent=5 // pred_check
        _
      $region22: #{tpu_custom_call.1} parent=5 // pred_check_branch
        %170 = sbr.rel (%p167) target = $region24
      $region23: #{tpu_custom_call.1} parent=5 // pred_region
        %s171 = ssub.s32 %s15, 1
        %s172 = sand.u32 %s51, 1
        %s173 = scalar_lea.sflag [#allocation3], %s172
        %s174 = sand.u32 %s51, 1
        %s175 = smul.addr %s174, 24
        %s176 = scalar_lea.vmem [#allocation2], %s175
        // Predicated region
        $region25: #{tpu_custom_call.1} parent=23 // pred_check
          %p177 = pneg %p64
        $region26: #{tpu_custom_call.1} parent=23 // pred_check_branch
          %179 = sbr.rel (%p177) target = $region28
        $region27: #{tpu_custom_call.1} parent=23 // pred_region
          %181 = dma.done %s173, 384
        $region28: #{tpu_custom_call.1} parent=23 // pred_fallthru
          _
        %s182 = sand.u32 %s51, 1
        %s183 = scalar_lea.sflag [#allocation3], %s182
        %s184 = sand.u32 %s51, 1
        %s185 = smul.addr %s184, 24
        %s186 = scalar_lea.vmem [#allocation2], %s185
        %p187 = pneg %p64
        %p188 = pneg %p61
        %p189 = pneg %p94
        %p190 = pneg %p91
        %s191 = sand.u32 %s81, 1
        %s192 = scalar_lea.sflag [#allocation4], %s191
        %s193 = sand.u32 %s81, 1
        %s194 = smul.addr %s193, 40
        %s195 = scalar_lea.vmem [#allocation5], %s194
        %p196 = pneg %p122
        %p197 = pneg %p119
        %s198 = sadd.s32 %s25, %s26
        %p199 = scmp.lt.s32.totalorder %s198, 1
        %s200 = scalar_select %p199, %s198, 1
        %s201 = smul.addr %s200, 8
        %s202 = scalar_lea.vmem %s2, %s201
        %s203 = sadd.s32 %s26, %s27
        %s204 = sadd.s32 %s26, %s27
        %s205 = sadd.s32 %s25, %s26
        %p206 = scmp.lt.s32.totalorder %s205, 1
        %s207 = scalar_select %p206, %s205, 1
        %s208 = smul.addr %s207, 8
        %s209 = scalar_lea.vmem %s2, %s208
        %s210 = sadd.s32 %s25, %s26
        %p211 = scmp.eq.s32.totalorder %s27, 0
        // Predicated region
        $region29: #{tpu_custom_call.1} parent=23 // pred_check
          %p212 = pneg %p211
        $region30: #{tpu_custom_call.1} parent=23 // pred_check_branch
          %214 = sbr.rel (%p212) target = $region32
        $region31: #{tpu_custom_call.1} parent=23 // pred_region
          %215 = vst [vmem:[%s209] sm:$0x1f] 0.0
        $region32: #{tpu_custom_call.1} parent=23 // pred_fallthru
          _
        %v216 = vld [vmem:[%s176] sm:$0xff]
        %s217 = scalar_lea.vmem %s176, 8 [#allocation2]
        %v218 = vld [vmem:[%s217] sm:$0xff]
        %s219 = scalar_lea.vmem %s176, 16 [#allocation2]
        %v220 = vld [vmem:[%s219] sm:$0xff]
        %vm221 = vcmp.ge.f32.partialorder %v218, 51.0
        %vm222 = vcmp.ge.f32.partialorder %v220, 30.0
        %vm223 = vcmp.le.f32.partialorder %v220, 215.0
        %vm224 = vmand %vm222, %vm223
        %vm225 = vcmp.ge.f32.partialorder %v216, 15.0
        %vm226 = vcmp.le.f32.partialorder %v216, 45.0
        %vm227 = vmand %vm225, %vm226
        %vm228 = vcmp.ge.f32.partialorder %v218, 100.0
        %vm229 = vcmp.ge.f32.partialorder %v220, 100.0
        %vm230 = vmand %vm228, %vm229
        %vm231 = vmand %vm227, %vm230
        %v232 = vsel %vm231, 1, 0
        %v233 = vcvt.s32.f32 %v232
        %234 = vst [vmem:[%s195] sm:$0xff] %v233
        %v235 = vld [vmem:[%s209] sm:$0x1]
        %v236 = vrot.slane %v233, 4
        %v237 = vadd.f32 %v233, %v236
        %v238 = vrot.slane %v237, 2
        %v239 = vadd.f32 %v237, %v238
        %v240 = vrot.slane %v239, 1
        %v241 = vadd.f32 %v239, %v240
        %v242 = vadd.f32 %v235, %v241
        %243 = vst [vmem:[%s209] sm:$0x1] %v242
        %vm244 = vcmp.ge.f32.partialorder %v216, 45.0
        %vm245 = vcmp.le.f32.partialorder %v216, 75.0
        %vm246 = vmand %vm244, %vm245
        %vm247 = vmand %vm221, %vm224
        %vm248 = vmand %vm246, %vm247
        %v249 = vsel %vm248, 1, 0
        %v250 = vcvt.s32.f32 %v249
        %s251 = scalar_lea.vmem %s195, 8 [#allocation5]
        %252 = vst [vmem:[%s251] sm:$0xff] %v250
        %v253 = vld [vmem:[%s209 + $0x1] sm:$0x1]
        %v254 = vrot.slane %v250, 4
        %v255 = vadd.f32 %v250, %v254
        %v256 = vrot.slane %v255, 2
        %v257 = vadd.f32 %v255, %v256
        %v258 = vrot.slane %v257, 1
        %v259 = vadd.f32 %v257, %v258
        %v260 = vadd.f32 %v253, %v259
        %261 = vst [vmem:[%s209 + $0x1] sm:$0x1] %v260
        %vm262 = vcmp.ge.f32.partialorder %v216, 75.0
        %vm263 = vcmp.le.f32.partialorder %v216, 135.0
        %vm264 = vmand %vm262, %vm263
        %vm265 = vcmp.ge.f32.partialorder %v220, 21.0
        %vm266 = vcmp.le.f32.partialorder %v220, 128.0
        %vm267 = vmand %vm265, %vm266
        %vm268 = vmand %vm221, %vm267
        %vm269 = vmand %vm264, %vm268
        %v270 = vsel %vm269, 1, 0
        %v271 = vcvt.s32.f32 %v270
        %s272 = scalar_lea.vmem %s195, 16 [#allocation5]
        %273 = vst [vmem:[%s272] sm:$0xff] %v271
        %v274 = vld [vmem:[%s209 + $0x2] sm:$0x1]
        %v275 = vrot.slane %v271, 4
        %v276 = vadd.f32 %v271, %v275
        %v277 = vrot.slane %v276, 2
        %v278 = vadd.f32 %v276, %v277
        %v279 = vrot.slane %v278, 1
        %v280 = vadd.f32 %v278, %v279
        %v281 = vadd.f32 %v274, %v280
        %282 = vst [vmem:[%s209 + $0x2] sm:$0x1] %v281
        %vm283 = vcmp.ge.f32.partialorder %v216, 50.0
        %vm284 = vcmp.le.f32.partialorder %v216, 185.0
        %vm285 = vmand %vm283, %vm284
        %vm286 = vcmp.ge.f32.partialorder %v220, 155.0
        %vm287 = vmand %vm285, %vm286
        %v288 = vsel %vm287, 1, 0
        %v289 = vcvt.s32.f32 %v288
        %s290 = scalar_lea.vmem %s195, 24 [#allocation5]
        %291 = vst [vmem:[%s290] sm:$0xff] %v289
        %v292 = vld [vmem:[%s209 + $0x3] sm:$0x1]
        %v293 = vrot.slane %v289, 4
        %v294 = vadd.f32 %v289, %v293
        %v295 = vrot.slane %v294, 2
        %v296 = vadd.f32 %v294, %v295
        %v297 = vrot.slane %v296, 1
        %v298 = vadd.f32 %v296, %v297
        %v299 = vadd.f32 %v292, %v298
        %300 = vst [vmem:[%s209 + $0x3] sm:$0x1] %v299
        %vm301 = vcmp.ge.f32.partialorder %v216, 165.0
        %vm302 = vcmp.le.f32.partialorder %v216, 180.0
        %vm303 = vmand %vm301, %vm302
        %vm304 = vcmp.ge.f32.partialorder %v216, 0.0
        %vm305 = vcmp.le.f32.partialorder %v216, 15.0
        %vm306 = vmand %vm304, %vm305
        %vm307 = vmor %vm303, %vm306
        %vm308 = vmand %vm307, %vm247
        %v309 = vsel %vm308, 1, 0
        %v310 = vcvt.s32.f32 %v309
        %s311 = scalar_lea.vmem %s195, 32 [#allocation5]
        %312 = vst [vmem:[%s311] sm:$0xff] %v310
        %v313 = vld [vmem:[%s209 + $0x4] sm:$0x1]
        %v314 = vrot.slane %v310, 4
        %v315 = vadd.f32 %v310, %v314
        %v316 = vrot.slane %v315, 2
        %v317 = vadd.f32 %v315, %v316
        %v318 = vrot.slane %v317, 1
        %v319 = vadd.f32 %v317, %v318
        %v320 = vadd.f32 %v313, %v319
        %321 = vst [vmem:[%s209 + $0x4] sm:$0x1] %v320
        %s322 = sand.u32 %s81, 1
        %s323 = scalar_lea.sflag [#allocation4], %s322
        %s324 = sand.u32 %s81, 1
        %s325 = smul.addr %s324, 40
        %s326 = scalar_lea.vmem [#allocation5], %s325
        %s327 = sadd.s32 %s25, %s26
        %p328 = scmp.lt.s32.totalorder %s327, 1
        %s329 = scalar_select %p328, %s327, 1
        %s330 = smul.addr %s329, 8
        %s331 = scalar_lea.vmem %s2, %s330
        // Predicated region
        $region33: #{tpu_custom_call.1} parent=23 // pred_check
          %p332 = pneg %p91
        $region34: #{tpu_custom_call.1} parent=23 // pred_check_branch
          %334 = sbr.rel (%p332) target = $region36
        $region35: #{tpu_custom_call.1} parent=23 // pred_region
          %s335 = sadd.s32 %s26, %s27
          %337 = vsyncadd %s323, 0
          %s338 = smul.addr %s25, 5
          %s339 = sadd.s32 %s335, %s338
          %s340 = smul.addr %s339, 8
          %s341 = scalar_lea.hbm %s1, %s340
          %s342 = sshll.u32 %s326, 4
          %s343 = int_to_ptr.vmem [resolvable:$true] %s342
          %s344 = sshll.u32 %s341, 4
          %s345 = int_to_ptr.hbm [resolvable:$true] %s344
          %350 = dma.vmem_to_hbm [thread:$0]  %s343, 640, %s345, %s323, 128, 128, 8
        $region36: #{tpu_custom_call.1} parent=23 // pred_fallthru
          _
        // Predicated region
        $region37: #{tpu_custom_call.1} parent=23 // pred_check
          %p351 = pneg %p119
        $region38: #{tpu_custom_call.1} parent=23 // pred_check_branch
          %353 = sbr.rel (%p351) target = $region40
        $region39: #{tpu_custom_call.1} parent=23 // pred_region
          %s354 = sadd.s32 %s25, %s26
        $region40: #{tpu_custom_call.1} parent=23 // pred_fallthru
          _
      $region24: #{tpu_custom_call.1} parent=5 // pred_fallthru
        _
      %p355 = scmp.le.s32.totalorder 2, %s15
      // Predicated region
      $region41: #{tpu_custom_call.1} parent=5 // pred_check
        %p356 = pneg %p355
      $region42: #{tpu_custom_call.1} parent=5 // pred_check_branch
        %358 = sbr.rel (%p356) target = $region44
      $region43: #{tpu_custom_call.1} parent=5 // pred_region
        %s359 = ssub.s32 %s15, 2
        // Predicated region
        $region45: #{tpu_custom_call.1} parent=43 // pred_check
          %p360 = pneg %p97
        $region46: #{tpu_custom_call.1} parent=43 // pred_check_branch
          %362 = sbr.rel (%p360) target = $region48
        $region47: #{tpu_custom_call.1} parent=43 // pred_region
          %s363 = sand.u32 %s82, 1
          %s364 = scalar_lea.sflag [#allocation4], %s363
          %s365 = sand.u32 %s82, 1
          %s366 = smul.addr %s365, 40
          %s367 = scalar_lea.vmem [#allocation5], %s366
          %369 = dma.done %s364, 640
        $region48: #{tpu_custom_call.1} parent=43 // pred_fallthru
          _
        // Predicated region
        $region49: #{tpu_custom_call.1} parent=43 // pred_check
          %p370 = pneg %p125
        $region50: #{tpu_custom_call.1} parent=43 // pred_check_branch
          %372 = sbr.rel (%p370) target = $region52
        $region51: #{tpu_custom_call.1} parent=43 // pred_region
          %s373 = sadd.s32 %s28, %s29
          %p374 = scmp.lt.s32.totalorder %s373, 1
          %s375 = scalar_select %p374, %s373, 1
          %s376 = smul.addr %s375, 8
          %s377 = scalar_lea.vmem %s2, %s376
        $region52: #{tpu_custom_call.1} parent=43 // pred_fallthru
          _
      $region44: #{tpu_custom_call.1} parent=5 // pred_fallthru
        _
    $region6: #{tpu_custom_call.1} parent=1 // loop_footer
      %s19 = sadd.s32 1, %s15
    $region7: #{tpu_custom_call.1} parent=1 // loop_footer_branch
      %14 = sbr.rel target = $region3
    $region8: #{tpu_custom_call.1} parent=1 // loop_exit
      _
    %378 = vsyncpa [#allocation3], 1
    %s379 = scalar_lea.sflag [#allocation3], 1
    %380 = vsyncpa %s379, 1
    %381 = vsyncpa [#allocation4], 1
    %s382 = scalar_lea.sflag [#allocation4], 1
    %383 = vsyncpa %s382, 1

</llo_original>
